<compile_context>
chip_gen: v7x
topology: tpu7x:2x2x1
jax: 0.10.0
libtpu: 0.0.40
codegen_flags: <defaults>
</compile_context>

<pallas_src>
import functools

import jax
import jax.numpy as jnp
from jax.experimental import pallas as pl
from jax.experimental.pallas import tpu as pltpu


def _round_up(v, m):
    return (v + m - 1) // m * m


def _default_compute_dtype():
    # bf16 MXU inputs on v6e/v7x; f32 on v5e/v4 (and as a safe fallback).
    try:
        kind = jax.devices()[0].device_kind.lower()
    except Exception:
        return jnp.float32
    if 'v6' in kind or 'v7' in kind:
        return jnp.bfloat16
    return jnp.float32


def _pick_col_chunk(tn, target=2048):
    """Largest divisor of tn that is <= target (bounds vreg pressure)."""
    if tn <= target:
        return tn
    best = 1
    for d in range(1, target + 1):
        if tn % d == 0:
            best = d
    return best if best >= 256 else tn


def _tcn_kernel(x_ref, w_ref, o_ref, stk_ref, *, kt, c_in, cpad, c_out,
                t_len, n_nodes, bb, act, compute_dtype, col_chunk):
    # x_ref   : (bb, c_in, T*N)     unpadded input block
    # w_ref   : (c_outp, K)         fused weights (bias + residual folded in),
    #                               K = kt*cpad + 1; c_outp = 2*c_out for GLU
    # o_ref   : (bb, c_out, T*N)
    # stk_ref : (K, bb*T*N)         VMEM scratch: kt time-shifted taps stacked
    #                               along the contraction axis + a ones bias row
    tn = t_len * n_nodes
    bbtn = bb * tn

    # Constant rows are rewritten EVERY grid step: the matching weight columns
    # are zero, but stale VMEM could be NaN and NaN*0 = NaN through the MXU.
    # Safe under megacore sharding of the "parallel" grid axis.
    stk_ref[kt * cpad:kt * cpad + 1, :] = jnp.ones((1, bbtn), compute_dtype)
    if cpad > c_in:
        zrow = jnp.zeros((cpad - c_in, bbtn), compute_dtype)
        for k in range(kt):
            stk_ref[k * cpad + c_in:(k + 1) * cpad, :] = zrow

    # Per-tap temporal boundary masks (padding=(1,0)); hoisted out of the
    # batch loop so the iota/compare is built once, not bb times.
    col = jax.lax.broadcasted_iota(jnp.int32, (c_in, tn), 1)
    zeros_tap = jnp.zeros((c_in, tn), compute_dtype)
    masks = []
    for k in range(kt):
        dt_lo = max(0, 1 - k)                 # first valid output timestep
        dt_hi = min(t_len, t_len + 1 - k)     # last valid output timestep + 1
        if dt_lo == 0 and dt_hi == t_len:
            masks.append(None)
        else:
            masks.append((col >= dt_lo * n_nodes) & (col < dt_hi * n_nodes))

    # Build the stacked shifted-tap operand: one XLU roll + one VPU select +
    # one full-width lane-dense store per (batch, tap).
    for i in range(bb):
        xi = x_ref[i].astype(compute_dtype)   # (c_in, T*N)
        base = i * tn
        for k in range(kt):
            # conv tap k of a padding=(1,0), kt==3 conv reads x[t + k - 1]
            shift = ((1 - k) * n_nodes) % tn
            tap = pltpu.roll(xi, shift, 1) if shift else xi
            if masks[k] is not None:
                tap = jnp.where(masks[k], tap, zeros_tap)
            stk_ref[k * cpad:k * cpad + c_in, base:base + tn] = tap

    # One fused matmul (conv + bias + residual) per column chunk.  Chunking
    # bounds the f32 live values and lets the VPU/EUP activation tail overlap
    # the next MXU chunk.  (Static Python loops == fully unrolled fori_loop.)
    w = w_ref[...]                            # (c_outp, K) — a few vregs
    n_chunks = tn // col_chunk
    for i in range(bb):
        base = i * tn
        for c in range(n_chunks):
            lo = base + c * col_chunk
            h32 = jnp.dot(w, stk_ref[:, lo:lo + col_chunk],
                          preferred_element_type=jnp.float32)
            if act == 'GLU':
                # row split at c_out is sublane aligned (c_out multiple of 8)
                h = h32[:c_out] * jax.nn.sigmoid(h32[c_out:])
            elif act == 'sigmoid':
                h = jax.nn.sigmoid(h32)
            else:  # 'linear'
                h = h32
            o_ref[i, :, c * col_chunk:(c + 1) * col_chunk] = h.astype(o_ref.dtype)


def _pack_weights(params, *, kt, c_in, c_out, act, cpad, compute_dtype):
    """Fuse conv taps, conv bias and the `align` residual into ONE matrix."""
    c_outp = 2 * c_out if act == 'GLU' else c_out
    k_total = kt * cpad + 1
    w = jnp.zeros((c_outp, k_total), jnp.float32)
    for k in range(kt):
        w = w.at[:, k * cpad:k * cpad + c_in].set(params['w_conv'][k])
    w = w.at[:, kt * cpad].set(params['b_conv'])            # bias column

    ctr = 1 * cpad                    # centre tap reads x[t] exactly (kt == 3)
    if c_in <= c_out:                 # align = identity / channel zero-pad
        ids = jnp.arange(c_in)
        w = w.at[ids, ctr + ids].add(1.0)
    else:                             # align = 1x1 conv; fold it in
        w = w.at[:c_out, ctr:ctr + c_in].add(params['w_align'])
        w = w.at[:c_out, kt * cpad].add(params['b_align'])
    return w.astype(compute_dtype)


def tcn_layer_forward(x, params, *, kt, c_in, c_out, act='linear',
                      compute_dtype=None, batch_block=None):
    """x: (B, c_in, T, N) -> (B, c_out, T, N).  Eval-mode forward."""
    B, C, T, N = x.shape
    assert C == c_in
    # Conv2d kernel (kt, 1) with padding=(1, 0): out T = T + 3 - kt.  The
    # residual add in the PyTorch forward only type-checks for kt == 3.
    assert T + 3 - kt == T, "tcn_layer forward requires kt == 3"

    if compute_dtype is None:
        compute_dtype = _default_compute_dtype()

    tn = T * N
    c_outp = 2 * c_out if act == 'GLU' else c_out
    out_dtype = x.dtype

    # Per-tap channel block padded to the sublane tile (8 rows f32 / 16 bf16)
    # so the stacking stores stay tile aligned.
    sub = 8 if jnp.dtype(compute_dtype).itemsize == 4 else 16
    cpad = _round_up(c_in, sub)
    k_total = kt * cpad + 1

    w = _pack_weights(params, kt=kt, c_in=c_in, c_out=c_out, act=act,
                      cpad=cpad, compute_dtype=compute_dtype)

    cbytes = jnp.dtype(compute_dtype).itemsize
    xbytes = jnp.dtype(x.dtype).itemsize
    obytes = jnp.dtype(out_dtype).itemsize
    w_vmem = 2 * c_outp * k_total * cbytes               # double-buffered weight
    per_b_vmem = (2 * c_in * tn * xbytes                 # double-buffered x blk
                  + 2 * c_out * tn * obytes              # double-buffered out blk
                  + k_total * tn * cbytes)               # stk scratch share

    # Batch packing: target a large per-step block (per-step overhead ~0.35us
    # dominates tiny steps), bounded by a ~40 MiB VMEM budget and by keeping
    # the grid length >= 2 so v7x's two TensorCores both get work.
    # NOTE: only divisors of B are accepted; pass batch_block explicitly for
    # awkward / prime batch sizes.
    if batch_block is None:
        vmem_budget = 40 * 1024 * 1024
        cap_vmem = max(1, (vmem_budget - w_vmem) // per_b_vmem)
        cap_lanes = max(1, (64 * 1024) // tn)            # <= ~64K lanes / step
        cap_grid = max(1, B // 2)                        # grid length >= 2
        cap = max(1, min(cap_vmem, cap_lanes, cap_grid))
        bb = 1
        for d in range(1, B + 1):
            if B % d == 0 and d <= cap:
                bb = d
    else:
        bb = batch_block
    assert B % bb == 0, "batch_block must divide the batch size"

    col_chunk = _pick_col_chunk(tn)

    x_flat = x.reshape(B, c_in, tn)        # free relabel; no pad, no HBM copy

    kernel = functools.partial(
        _tcn_kernel, kt=kt, c_in=c_in, cpad=cpad, c_out=c_out, t_len=T,
        n_nodes=N, bb=bb, act=act, compute_dtype=compute_dtype,
        col_chunk=col_chunk)

    flops = 2 * B * c_outp * k_total * tn
    transc = B * c_out * tn if act in ('GLU', 'sigmoid') else 0
    bytes_accessed = (x.size * xbytes + w.size * w.dtype.itemsize
                      + B * c_out * tn * obytes)

    # VMEM limit from the actual footprint, clamped to 48 MiB (v7x headroom).
    vmem_need = bb * per_b_vmem + w_vmem
    vmem_limit = int(min(48 * 1024 * 1024,
                         max(16 * 1024 * 1024, 2 * vmem_need + 2 * 1024 * 1024)))

    out_flat = pl.pallas_call(
        kernel,
        out_shape=jax.ShapeDtypeStruct((B, c_out, tn), out_dtype),
        grid_spec=pltpu.PrefetchScalarGridSpec(
            num_scalar_prefetch=0,
            grid=(B // bb,),
            in_specs=[
                pl.BlockSpec((bb, c_in, tn), lambda bi: (bi, 0, 0)),
                pl.BlockSpec((c_outp, k_total), lambda bi: (0, 0)),
            ],
            out_specs=pl.BlockSpec((bb, c_out, tn), lambda bi: (bi, 0, 0)),
            scratch_shapes=[pltpu.VMEM((k_total, bb * tn), compute_dtype)],
        ),
        compiler_params=pltpu.CompilerParams(
            dimension_semantics=("parallel",),
            vmem_limit_bytes=vmem_limit),
        cost_estimate=pl.CostEstimate(flops=int(flops),
                                      transcendentals=int(transc),
                                      bytes_accessed=int(bytes_accessed)),
    )(x_flat, w)

    # TODO(synk): training-mode dropout (random mask) not implemented; eval
    # (identity) semantics are reproduced here.
    return out_flat.reshape(B, c_out, T, N)


# ----------------------------- reference (pure JAX) -------------------------

def _align(x, c_out, w_align=None, b_align=None):
    _, c_in, _, _ = x.shape
    if c_in > c_out:
        y = jnp.einsum('oc,bctn->botn', w_align, x, precision='highest')
        return y + b_align[None, :, None, None]
    if c_in < c_out:
        return jnp.pad(x, ((0, 0), (0, c_out - c_in), (0, 0), (0, 0)))
    return x


def _reference_forward(x, params, *, kt, c_in, c_out, act='linear'):
    B, _, T, N = x.shape
    c_outp = 2 * c_out if act == 'GLU' else c_out
    x_in = _align(x, c_out, params.get('w_align'), params.get('b_align'))
    xp = jnp.pad(x, ((0, 0), (0, 0), (1, 1), (0, 0)))
    conv = jnp.zeros((B, c_outp, T, N), jnp.float32)
    for k in range(kt):
        conv = conv + jnp.einsum('oc,bctn->botn', params['w_conv'][k],
                                 xp[:, :, k:k + T, :], precision='highest')
    conv = conv + params['b_conv'][None, :, None, None]
    if act == 'GLU':
        return (conv[:, :c_out] + x_in) * jax.nn.sigmoid(conv[:, c_out:])
    if act == 'sigmoid':
        return jax.nn.sigmoid(conv + x_in)
    return conv + x_in


def _init_params(key, kt, c_in, c_out, act):
    c_outp = 2 * c_out if act == 'GLU' else c_out
    k1, k2, k3, k4 = jax.random.split(key, 4)
    fan_in = c_in * kt
    bound = 1.0 / (fan_in ** 0.5)
    params = {
        # (kt, c_outp, c_in) == torch weight (c_outp, c_in, kt, 1) permuted
        'w_conv': jax.random.uniform(k1, (kt, c_outp, c_in), jnp.float32,
                                     -bound, bound),
        'b_conv': jax.random.uniform(k2, (c_outp,), jnp.float32, -bound, bound),
    }
    if c_in > c_out:  # align's 1x1 conv parameters
        ab = 1.0 / (c_in ** 0.5)
        params['w_align'] = jax.random.uniform(k3, (c_out, c_in), jnp.float32,
                                               -ab, ab)
        params['b_align'] = jax.random.uniform(k4, (c_out,), jnp.float32,
                                               -ab, ab)
    return params


if __name__ == "__main__":
    key = jax.random.PRNGKey(0)
    B, T, N = 2, 16, 16

    # --- Config 1: GLU, c_in < c_out (channel-pad residual) -----------------
    kt, c_in, c_out, act = 3, 4, 8, 'GLU'
    kx, kp, key = jax.random.split(key, 3)
    x = jax.random.normal(kx, (B, c_in, T, N), jnp.float32)
    params = _init_params(kp, kt, c_in, c_out, act)
    ref = _reference_forward(x, params, kt=kt, c_in=c_in, c_out=c_out, act=act)

    fwd_f32 = jax.jit(functools.partial(tcn_layer_forward, kt=kt, c_in=c_in,
                                        c_out=c_out, act=act,
                                        compute_dtype=jnp.float32))
    out_f32 = jax.block_until_ready(fwd_f32(x, params))
    assert out_f32.shape == (B, c_out, T, N)
    assert jnp.allclose(out_f32, ref, atol=1e-4, rtol=1e-4), "GLU f32 mismatch"

    fwd_bf16 = jax.jit(functools.partial(tcn_layer_forward, kt=kt, c_in=c_in,
                                         c_out=c_out, act=act,
                                         compute_dtype=jnp.bfloat16))
    out_bf16 = jax.block_until_ready(fwd_bf16(x, params))
    assert jnp.allclose(out_bf16, ref, atol=2e-1, rtol=2e-1), "GLU bf16 mismatch"
    assert jnp.mean(jnp.abs(out_bf16 - ref)) < 2e-2, "GLU bf16 mean error"

    # default (chip-aware) compute dtype path
    fwd_def = jax.jit(functools.partial(tcn_layer_forward, kt=kt, c_in=c_in,
                                        c_out=c_out, act=act))
    out_def = jax.block_until_ready(fwd_def(x, params))
    assert jnp.allclose(out_def, ref, atol=2e-1, rtol=2e-1), "GLU default mismatch"

    # --- Config 2: sigmoid activation, c_in == c_out (identity residual) ----
    kt, c_in, c_out, act = 3, 8, 8, 'sigmoid'
    kx, kp, key = jax.random.split(key, 3)
    x = jax.random.normal(kx, (B, c_in, T, N), jnp.float32)
    params = _init_params(kp, kt, c_in, c_out, act)
    ref = _reference_forward(x, params, kt=kt, c_in=c_in, c_out=c_out, act=act)
    out = jax.block_until_ready(
        tcn_layer_forward(x, params, kt=kt, c_in=c_in, c_out=c_out, act=act,
                          compute_dtype=jnp.float32))
    assert jnp.allclose(out, ref, atol=1e-4, rtol=1e-4), "sigmoid mismatch"

    # --- Config 3: linear activation, c_in > c_out (1x1 align conv folded) --
    kt, c_in, c_out, act = 3, 16, 8, 'linear'
    kx, kp, key = jax.random.split(key, 3)
    x = jax.random.normal(kx, (B, c_in, T, N), jnp.float32)
    params = _init_params(kp, kt, c_in, c_out, act)
    ref = _reference_forward(x, params, kt=kt, c_in=c_in, c_out=c_out, act=act)
    out = jax.block_until_ready(
        tcn_layer_forward(x, params, kt=kt, c_in=c_in, c_out=c_out, act=act,
                          compute_dtype=jnp.float32))
    assert jnp.allclose(out, ref, atol=1e-4, rtol=1e-4), "linear mismatch"

    print("KERNEL_OK")
</pallas_src>

<mosaic_0001>
module attributes {stable_mosaic.version = 11 : i64} {
  func.func @_tcn_kernel(%arg0: i32, %arg1: memref<1x4x256xf32, #tpu.memory_space<vmem>>, %arg2: memref<16x25xf32, #tpu.memory_space<vmem>>, %arg3: memref<1x8x256xf32, #tpu.memory_space<vmem>>, %arg4: memref<25x256xf32, #tpu.memory_space<vmem>>) attributes {dimension_semantics = [#tpu.dimension_semantics<parallel>], iteration_bounds = array<i64: 2>, scalar_prefetch = 0 : i64, scratch_operands = 1 : i64, tpu.core_type = #tpu.core_type<tc>, window_params = [{transform_indices = @transform_0, window_bounds = array<i64: 1, 4, 256>}, {pipeline_mode = #tpu.pipeline_mode<synchronous>, transform_indices = @transform_1, window_bounds = array<i64: 16, 25>}, {transform_indices = @transform_2, window_bounds = array<i64: 1, 8, 256>}]} {
    %cst = arith.constant 1.000000e+00 : f32
    %0 = vector.broadcast %cst : f32 to vector<1x256xf32>
    %c24 = arith.constant 24 : index
    %c0 = arith.constant 0 : index
    %1 = vector.load %arg4[%c24, %c0] : memref<25x256xf32, #tpu.memory_space<vmem>>, vector<1x256xf32>
    tpu.vector_store %arg4[%c24, %c0], %0 {strides = array<i32>} : memref<25x256xf32, #tpu.memory_space<vmem>>, vector<1x256xf32>,
    %cst_0 = arith.constant 0.000000e+00 : f32
    %2 = vector.broadcast %cst_0 : f32 to vector<4x256xf32>
    %c4 = arith.constant 4 : index
    %c0_1 = arith.constant 0 : index
    %3 = vector.load %arg4[%c4, %c0_1] : memref<25x256xf32, #tpu.memory_space<vmem>>, vector<4x256xf32>
    tpu.vector_store %arg4[%c4, %c0_1], %2 {strides = array<i32>} : memref<25x256xf32, #tpu.memory_space<vmem>>, vector<4x256xf32>,
    %c12 = arith.constant 12 : index
    %c0_2 = arith.constant 0 : index
    %4 = vector.load %arg4[%c12, %c0_2] : memref<25x256xf32, #tpu.memory_space<vmem>>, vector<4x256xf32>
    tpu.vector_store %arg4[%c12, %c0_2], %2 {strides = array<i32>} : memref<25x256xf32, #tpu.memory_space<vmem>>, vector<4x256xf32>,
    %c20 = arith.constant 20 : index
    %c0_3 = arith.constant 0 : index
    %5 = vector.load %arg4[%c20, %c0_3] : memref<25x256xf32, #tpu.memory_space<vmem>>, vector<4x256xf32>
    tpu.vector_store %arg4[%c20, %c0_3], %2 {strides = array<i32>} : memref<25x256xf32, #tpu.memory_space<vmem>>, vector<4x256xf32>,
    %6 = tpu.iota {dimensions = array<i32: 1>} : vector<4x256xi32>
    %cst_4 = arith.constant 0.000000e+00 : f32
    %7 = vector.broadcast %cst_4 : f32 to vector<4x256xf32>
    %c16_i32 = arith.constant 16 : i32
    %8 = vector.broadcast %c16_i32 : i32 to vector<4x256xi32>
    %9 = arith.cmpi sge, %6, %8 : vector<4x256xi32>
    %c256_i32 = arith.constant 256 : i32
    %10 = vector.broadcast %c256_i32 : i32 to vector<4x256xi32>
    %11 = arith.cmpi slt, %6, %10 : vector<4x256xi32>
    %12 = arith.andi %9, %11 : vector<4x256xi1>
    %c0_i32 = arith.constant 0 : i32
    %13 = vector.broadcast %c0_i32 : i32 to vector<4x256xi32>
    %14 = arith.cmpi sge, %6, %13 : vector<4x256xi32>
    %c240_i32 = arith.constant 240 : i32
    %15 = vector.broadcast %c240_i32 : i32 to vector<4x256xi32>
    %16 = arith.cmpi slt, %6, %15 : vector<4x256xi32>
    %17 = arith.andi %14, %16 : vector<4x256xi1>
    %c0_5 = arith.constant 0 : index
    %c0_6 = arith.constant 0 : index
    %c0_7 = arith.constant 0 : index
    %18 = vector.load %arg1[%c0_5, %c0_6, %c0_7] : memref<1x4x256xf32, #tpu.memory_space<vmem>>, vector<1x4x256xf32>
    %19 = vector.shape_cast %18 : vector<1x4x256xf32> to vector<4x256xf32>
    %c16_i32_8 = arith.constant 16 : i32
    %20 = tpu.dynamic_rotate %19 by %c16_i32_8 dim 1 : vector<4x256xf32>, i32 -> vector<4x256xf32>
    %21 = arith.select %12, %20, %7 : vector<4x256xi1>, vector<4x256xf32>
    %c0_9 = arith.constant 0 : index
    %c0_10 = arith.constant 0 : index
    %22 = vector.load %arg4[%c0_9, %c0_10] : memref<25x256xf32, #tpu.memory_space<vmem>>, vector<4x256xf32>
    tpu.vector_store %arg4[%c0_9, %c0_10], %21 {strides = array<i32>} : memref<25x256xf32, #tpu.memory_space<vmem>>, vector<4x256xf32>,
    %c8 = arith.constant 8 : index
    %c0_11 = arith.constant 0 : index
    %23 = vector.load %arg4[%c8, %c0_11] : memref<25x256xf32, #tpu.memory_space<vmem>>, vector<4x256xf32>
    tpu.vector_store %arg4[%c8, %c0_11], %19 {strides = array<i32>} : memref<25x256xf32, #tpu.memory_space<vmem>>, vector<4x256xf32>,
    %c240_i32_12 = arith.constant 240 : i32
    %24 = tpu.dynamic_rotate %19 by %c240_i32_12 dim 1 : vector<4x256xf32>, i32 -> vector<4x256xf32>
    %25 = arith.select %17, %24, %7 : vector<4x256xi1>, vector<4x256xf32>
    %c16 = arith.constant 16 : index
    %c0_13 = arith.constant 0 : index
    %26 = vector.load %arg4[%c16, %c0_13] : memref<25x256xf32, #tpu.memory_space<vmem>>, vector<4x256xf32>
    tpu.vector_store %arg4[%c16, %c0_13], %25 {strides = array<i32>} : memref<25x256xf32, #tpu.memory_space<vmem>>, vector<4x256xf32>,
    %c0_14 = arith.constant 0 : index
    %c0_15 = arith.constant 0 : index
    %27 = vector.load %arg2[%c0_14, %c0_15] : memref<16x25xf32, #tpu.memory_space<vmem>>, vector<16x25xf32>
    %c0_16 = arith.constant 0 : index
    %c0_17 = arith.constant 0 : index
    %28 = vector.load %arg4[%c0_16, %c0_17] : memref<25x256xf32, #tpu.memory_space<vmem>>, vector<25x256xf32>
    %cst_18 = arith.constant dense<0.000000e+00> : vector<16x256xf32>
    %29 = tpu.matmul %27, %28, %cst_18 {dimension_numbers = #tpu.dot_dimension_numbers<[1], [0], [0], [1], [0, 0, 1, 1], [], []>} : vector<16x25xf32>, vector<25x256xf32>, vector<16x256xf32> -> vector<16x256xf32>
    %30 = vector.extract_strided_slice %29 {offsets = [0, 0], sizes = [8, 256], strides = [1, 1]} : vector<16x256xf32> to vector<8x256xf32>
    %31 = vector.extract_strided_slice %29 {offsets = [8, 0], sizes = [8, 256], strides = [1, 1]} : vector<16x256xf32> to vector<8x256xf32>
    %32 = arith.negf %31 : vector<8x256xf32>
    %33 = math.exp %32 : vector<8x256xf32>
    %cst_19 = arith.constant 1.000000e+00 : f32
    %34 = vector.broadcast %cst_19 : f32 to vector<8x256xf32>
    %35 = arith.addf %34, %33 : vector<8x256xf32>
    %36 = arith.divf %34, %35 : vector<8x256xf32>
    %37 = arith.mulf %30, %36 : vector<8x256xf32>
    %c0_20 = arith.constant 0 : index
    %c0_21 = arith.constant 0 : index
    %c0_22 = arith.constant 0 : index
    %38 = vector.load %arg3[%c0_20, %c0_21, %c0_22] : memref<1x8x256xf32, #tpu.memory_space<vmem>>, vector<1x8x256xf32>
    %39 = vector.shape_cast %38 : vector<1x8x256xf32> to vector<8x256xf32>
    %40 = vector.shape_cast %37 : vector<8x256xf32> to vector<1x8x256xf32>
    tpu.vector_store %arg3[%c0_20, %c0_21, %c0_22], %40 {strides = array<i32>} : memref<1x8x256xf32, #tpu.memory_space<vmem>>, vector<1x8x256xf32>,
    return
  }
  func.func @transform_0(%arg0: i32) -> (i32, i32, i32) {
    %c0_i32 = arith.constant 0 : i32
    %c0_i32_0 = arith.constant 0 : i32
    %c0_i32_1 = arith.constant 0 : i32
    return %arg0, %c0_i32, %c0_i32_0 : i32, i32, i32
  }
  func.func @transform_1(%arg0: i32) -> (i32, i32) {
    %c0_i32 = arith.constant 0 : i32
    %c0_i32_0 = arith.constant 0 : i32
    %c0_i32_1 = arith.constant 0 : i32
    return %c0_i32, %c0_i32_0 : i32, i32
  }
  func.func @transform_2(%arg0: i32) -> (i32, i32, i32) {
    %c0_i32 = arith.constant 0 : i32
    %c0_i32_0 = arith.constant 0 : i32
    %c0_i32_1 = arith.constant 0 : i32
    return %arg0, %c0_i32, %c0_i32_0 : i32, i32, i32
  }
}

</mosaic_0001>

<llo_original>
// kernel: tcn_layer_forward.1
$region0: #{tcn_layer_forward.1}
  #allocation0 [shape = 'u32[]', space=smem, size = 0x4, offset = 0x4, fixed_abs, tag = 'smem constant byte address 0x4 - core index']
  #allocation1 [shape = 'u32[144,128]{1,0:T(1,128)}', space=vmem, size = 0x12000, scoped, tag = 'internal scratch']
  #allocation2 [shape = 'f32[25,256]{1,0:T(8,128)}', space=vmem, size = 0x8000, scoped, tag = 'scratch operand']
  %s0 = inlined_call_operand.vmem [shape: f32[2,4,256], index: 0, kind: input, shape index: {}]
  %s1 = inlined_call_operand.vmem [shape: f32[16,25], index: 1, kind: input, shape index: {}]
  %s2 = inlined_call_operand.vmem [shape: f32[2,8,256], index: 2, kind: output, shape index: {}]
  %s3 = sld [smem:[#allocation0]]
  $region41: #{tcn_layer_forward.1} parent=0
    _
  %s5 = ssub.s32 1, %s3
  %s6 = scalar_select 0, %s5, %s3
  loop: start=0, step=1, limit=4
  $region2: #{tcn_layer_forward.1} parent=0 // loop_pre_header
    _
  $region3: #{tcn_layer_forward.1} parent=0 // loop_header
    %s8 = sphi 0, %s12
    %p9 = scmp.ge.s32.totalorder %s8, 4
    %s18 = sphi 0, %s20
    %s21 = sphi 0, %s18
    %s22 = sphi 0, %s21
    %s38 = sphi 0, %s22
    %s42 = sphi 0, %s42
    %s44 = sphi 0, %s42
    %s45 = sphi 0, %s44
    %s59 = sphi 0, %s45
    %s65 = sphi 0, %s67
    %s68 = sphi 0, %s65
    %s69 = sphi 0, %s68
    %s85 = sphi 0, %s69
  $region4: #{tcn_layer_forward.1} parent=0 // loop_header_branch
    %11 = sbr.rel (%p9) target = $region8
  $region5: #{tcn_layer_forward.1} parent=0 // loop_body
    %s13 = ssub.s32 %s8, 1
    %s14 = ssub.s32 %s8, 2
    %s15 = sadd.s32 %s8, 1
    %s16 = ssub.s32 %s8, %s15
    %p17 = scmp.eq.s32.totalorder %s16, 0
    %s19 = sadd.s32 %s18, 1
    %s20 = scalar_select %p17, %s18, %s19
    %p23 = pneg %p17
    %p24 = scmp.eq.s32.totalorder %s8, 1
    %p25 = por %p23, %p24
    %p26 = scmp.ne.s32.totalorder %s18, %s21
    %p27 = scmp.eq.s32.totalorder %s8, 0
    %p28 = por %p26, %p27
    %p29 = scmp.ne.s32.totalorder %s18, %s21
    %p30 = scmp.eq.s32.totalorder %s13, 1
    %p31 = por %p29, %p30
    %p32 = scmp.ne.s32.totalorder %s21, %s22
    %p33 = scmp.eq.s32.totalorder %s13, 0
    %p34 = por %p32, %p33
    %p35 = scmp.ne.s32.totalorder %s21, %s22
    %p36 = scmp.eq.s32.totalorder %s14, 1
    %p37 = por %p35, %p36
    %p39 = scmp.ne.s32.totalorder %s22, %s38
    %p40 = scmp.eq.s32.totalorder %s14, 0
    %p41 = por %p39, %p40
    %s43 = sadd.s32 %s42, 1
    %p46 = scmp.eq.s32.totalorder %s8, 1
    %p47 = scmp.ne.s32.totalorder %s42, %s44
    %p48 = scmp.eq.s32.totalorder %s8, 0
    %p49 = por %p47, %p48
    %p50 = scmp.ne.s32.totalorder %s42, %s44
    %p51 = scmp.eq.s32.totalorder %s13, 1
    %p52 = por %p50, %p51
    %p53 = scmp.ne.s32.totalorder %s44, %s45
    %p54 = scmp.eq.s32.totalorder %s13, 0
    %p55 = por %p53, %p54
    %p56 = scmp.ne.s32.totalorder %s44, %s45
    %p57 = scmp.eq.s32.totalorder %s14, 1
    %p58 = por %p56, %p57
    %p60 = scmp.ne.s32.totalorder %s45, %s59
    %p61 = scmp.eq.s32.totalorder %s14, 0
    %p62 = por %p60, %p61
    %s63 = ssub.s32 %s8, %s15
    %p64 = scmp.eq.s32.totalorder %s63, 0
    %s66 = sadd.s32 %s65, 1
    %s67 = scalar_select %p64, %s65, %s66
    %p70 = pneg %p64
    %p71 = scmp.eq.s32.totalorder %s8, 1
    %p72 = por %p70, %p71
    %p73 = scmp.ne.s32.totalorder %s65, %s68
    %p74 = scmp.eq.s32.totalorder %s8, 0
    %p75 = por %p73, %p74
    %p76 = scmp.ne.s32.totalorder %s65, %s68
    %p77 = scmp.eq.s32.totalorder %s13, 1
    %p78 = por %p76, %p77
    %p79 = scmp.ne.s32.totalorder %s68, %s69
    %p80 = scmp.eq.s32.totalorder %s13, 0
    %p81 = por %p79, %p80
    %p82 = scmp.ne.s32.totalorder %s68, %s69
    %p83 = scmp.eq.s32.totalorder %s14, 1
    %p84 = por %p82, %p83
    %p86 = scmp.ne.s32.totalorder %s69, %s85
    %p87 = scmp.eq.s32.totalorder %s14, 0
    %p88 = por %p86, %p87
    %p89 = scmp.le.s32.totalorder 1, %s8
    %p90 = scmp.lt.s32.totalorder %s8, 3
    %p91 = pnand %p89, %p90
    %p92 = pneg %p91
    // Predicated region
    $region9: #{tcn_layer_forward.1} parent=5 // pred_check
      _
    $region10: #{tcn_layer_forward.1} parent=5 // pred_check_branch
      %94 = sbr.rel (%p91) target = $region12
    $region11: #{tcn_layer_forward.1} parent=5 // pred_region
      %s95 = ssub.s32 %s8, 1
      // Predicated region
      $region13: #{tcn_layer_forward.1} parent=11 // pred_check
        %p96 = pneg %p55
      $region14: #{tcn_layer_forward.1} parent=11 // pred_check_branch
        %98 = sbr.rel (%p96) target = $region16
      $region15: #{tcn_layer_forward.1} parent=11 // pred_region
        _
      $region16: #{tcn_layer_forward.1} parent=11 // pred_fallthru
        _
    $region12: #{tcn_layer_forward.1} parent=5 // pred_fallthru
      _
    %p99 = scmp.lt.s32.totalorder %s8, 2
    // Predicated region
    $region17: #{tcn_layer_forward.1} parent=5 // pred_check
      %p100 = pneg %p99
    $region18: #{tcn_layer_forward.1} parent=5 // pred_check_branch
      %102 = sbr.rel (%p100) target = $region20
    $region19: #{tcn_layer_forward.1} parent=5 // pred_region
      // Predicated region
      $region21: #{tcn_layer_forward.1} parent=19 // pred_check
        %p103 = pneg %p28
      $region22: #{tcn_layer_forward.1} parent=19 // pred_check_branch
        %105 = sbr.rel (%p103) target = $region24
      $region23: #{tcn_layer_forward.1} parent=19 // pred_region
        %p106 = scmp.lt.s32.totalorder %s8, 1
        %s107 = scalar_select %p106, %s8, 1
        %s108 = smul.addr %s107, 2
        %s109 = smul.addr %s108, 4
        %s110 = scalar_lea.vmem %s0, %s109
      $region24: #{tcn_layer_forward.1} parent=19 // pred_fallthru
        _
    $region20: #{tcn_layer_forward.1} parent=5 // pred_fallthru
      _
    %p111 = scmp.le.s32.totalorder 1, %s8
    %p112 = scmp.lt.s32.totalorder %s8, 3
    %p113 = pnand %p111, %p112
    %p114 = pneg %p113
    // Predicated region
    $region25: #{tcn_layer_forward.1} parent=5 // pred_check
      _
    $region26: #{tcn_layer_forward.1} parent=5 // pred_check_branch
      %116 = sbr.rel (%p113) target = $region28
    $region27: #{tcn_layer_forward.1} parent=5 // pred_region
      %s117 = ssub.s32 %s8, 1
      %p118 = scmp.lt.s32.totalorder %s13, 1
      %s119 = scalar_select %p118, %s13, 1
      %s120 = smul.addr %s119, 2
      %s121 = smul.addr %s120, 4
      %s122 = scalar_lea.vmem %s0, %s121
      %p123 = pneg %p34
      %p124 = pneg %p31
      %p125 = pneg %p55
      %p126 = pneg %p52
      %p127 = pneg %p81
      %p128 = pneg %p78
      %p129 = scmp.lt.s32.totalorder %s13, 1
      %s130 = scalar_select %p129, %s13, 1
      %s131 = smul.addr %s130, 2
      %s132 = smul.addr %s131, 8
      %s133 = scalar_lea.vmem %s2, %s132
      %p134 = scmp.lt.s32.totalorder %s13, 1
      %s135 = scalar_select %p134, %s13, 1
      %s136 = smul.addr %s135, 2
      %s137 = smul.addr %s136, 4
      %s138 = scalar_lea.vmem %s0, %s137
      %p139 = scmp.lt.s32.totalorder %s13, 1
      %s140 = scalar_select %p139, %s13, 1
      %s141 = smul.addr %s140, 2
      %s142 = smul.addr %s141, 8
      %s143 = scalar_lea.vmem %s2, %s142
      %v144 = vlaneseq
      %vm145 = vcmp.ge.s32.totalorder %v144, 0
      %vm146 = vcmp.lt.s32.totalorder %v144, 256
      %vm147 = vmand %vm145, %vm146
      %s148 = scalar_lea.vmem [#allocation2], 48
      %149 = vst.msk [vmem:[%s148] ss:$8 sm:$0x3] %vm147, 1.0
      %150 = vst.msk [vmem:[%s148] ss:$8 sm:$0x0] %vm147, 1.0
      %151 = vst [vmem:[#allocation2] sm:$0xf0] 0.0
      %152 = vst [vmem:[#allocation2 + $0x8] sm:$0xf0] 0.0
      %153 = vst [vmem:[#allocation2 + $0x10] sm:$0xf0] 0.0
      %154 = vst [vmem:[#allocation2 + $0x18] sm:$0xf0] 0.0
      %155 = vst [vmem:[#allocation2 + $0x20] sm:$0xf0] 0.0
      %156 = vst [vmem:[#allocation2 + $0x28] sm:$0xf0] 0.0
      %v157 = vlaneseq
      %v158 = vand.u32 %v157, 127
      %v159 = vadd.s32 %v158, 128
      %vm160 = vcmp.ge.s32.totalorder %v158, 16
      %vm161 = vcmp.ge.s32.totalorder %v159, 16
      %vm162 = vcmp.lt.s32.totalorder %v158, 256
      %vm163 = vcmp.lt.s32.totalorder %v159, 256
      %vm164 = vmand %vm160, %vm162
      %vm165 = vmand %vm161, %vm163
      %vm166 = vcmp.ge.s32.totalorder %v158, 0
      %vm167 = vcmp.ge.s32.totalorder %v159, 0
      %vm168 = vcmp.lt.s32.totalorder %v158, 240
      %vm169 = vcmp.lt.s32.totalorder %v159, 240
      %vm170 = vmand %vm166, %vm168
      %vm171 = vmand %vm167, %vm169
      %v172 = vld [vmem:[%s138] sm:$0xff]
      %v174 = vcombine.high %v172, %v172
      %176 = vrot.lane.b32.xlu0 %v172, 16
      %v177 = vpop.permute.xlu0 %176
      %178 = vrot.lane.b32.xlu0 %v174, 16
      %v179 = vpop.permute.xlu0 %178
      %vm180 = vcmp.lt.s32.totalorder %v158, 16
      %v181 = vsel %vm180, %v177, %v179
      %v182 = vsel %vm180, %v179, %v177
      %v183 = vsel %vm164, %v182, 0.0
      %v184 = vsel %vm165, %v181, 0.0
      %185 = vst [vmem:[#allocation2] sm:$0xf] %v183
      %186 = vst [vmem:[#allocation2 + $0x8] sm:$0xf] %v184
      %187 = vst [vmem:[#allocation2 + $0x10] sm:$0xf] %v172
      %188 = vst [vmem:[#allocation2 + $0x18] sm:$0xf] %v174
      %189 = vrot.lane.b32.xlu0 %v172, 112
      %v190 = vpop.permute.xlu0 %189
      %191 = vrot.lane.b32.xlu0 %v174, 112
      %v192 = vpop.permute.xlu0 %191
      %vm193 = vcmp.lt.s32.totalorder %v158, 112
      %v194 = vsel %vm193, %v190, %v192
      %v195 = vsel %vm193, %v192, %v190
      %v196 = vsel %vm170, %v194, 0.0
      %v197 = vsel %vm171, %v195, 0.0
      %198 = vst [vmem:[#allocation2 + $0x20] sm:$0xf] %v196
      %199 = vst [vmem:[#allocation2 + $0x28] sm:$0xf] %v197
      %v200 = vld [vmem:[%s1] sm:$0xff]
      %v201 = vld [vmem:[%s1 + $0x8] sm:$0xff]
      %v202 = vld [vmem:[#allocation2] sm:$0xff]
      %v203 = vld [vmem:[#allocation2 + $0x8] sm:$0xff]
      %v204 = vld [vmem:[#allocation2 + $0x10] sm:$0xff]
      %v205 = vld [vmem:[#allocation2 + $0x18] sm:$0xff]
      %v206 = vld [vmem:[#allocation2 + $0x20] sm:$0xff]
      %v207 = vld [vmem:[#allocation2 + $0x28] sm:$0xff]
      %v208 = vld [vmem:[#allocation2 + $0x30] sm:$0x1]
      %v209 = vld [vmem:[#allocation2 + $0x38] sm:$0x1]
      %vm210 = vcmask 203776
      %v212 = vsel %vm210, %v200, 0
      %v215 = vsel %vm210, %v201, 0
      %vm217 = vcmask 1040384
      %v219 = vsel %vm217, %v208, 0
      %v222 = vsel %vm217, %v209, 0
      %224 = vmatprep.subr.mxu0 %v203
      %225 = vmatpush1.msra.mxu0 %v202
      %226 = vmatprep.subr.mxu0 %v205
      %227 = vmatpush1.msra.mxu0 %v204
      %228 = vmatprep.subr.mxu0 %v207
      %229 = vmatpush1.msra.mxu0 %v206
      %230 = vmatprep.subr.mxu0 %v222
      %231 = vmatpush1.msra.mxu0 %v219
      %232 = vmatprep.subr.mxu0 0.0
      %233 = vmatpush1.msra.mxu0 0.0
      %234 = vmatprep.subr.mxu0 0.0
      %235 = vmatpush1.msra.mxu0 0.0
      %236 = vmatprep.subr.mxu0 0.0
      %237 = vmatpush1.msra.mxu0 0.0
      %238 = vmatprep.subr.mxu0 0.0
      %239 = vmatpush1.msra.mxu0 0.0
      %240 = vmatprep.subr.mxu0 0.0
      %241 = vmatpush1.msra.mxu0 0.0
      %242 = vmatprep.subr.mxu0 0.0
      %243 = vmatpush1.msra.mxu0 0.0
      %244 = vmatprep.subr.mxu0 0.0
      %245 = vmatpush1.msra.mxu0 0.0
      %246 = vmatprep.subr.mxu0 0.0
      %247 = vmatpush1.msra.mxu0 0.0
      %248 = vmatprep.subr.mxu0 0.0
      %249 = vmatpush1.msra.mxu0 0.0
      %250 = vmatprep.subr.mxu0 0.0
      %251 = vmatpush1.msra.mxu0 0.0
      %252 = vmatprep.subr.mxu0 0.0
      %253 = vmatpush1.msra.mxu0 0.0
      %254 = vmatprep.subr.mxu0 0.0
      %255 = vmatpush1.msra.mxu0 0.0
      %256 = vmatprep.subr.mxu0 0.0
      %257 = vmatpush1.msra.mxu0 0.0
      %258 = vmatprep.subr.mxu0 0.0
      %259 = vmatpush1.msra.mxu0 0.0
      %260 = vmatprep.subr.mxu0 0.0
      %261 = vmatpush1.msra.mxu0 0.0
      %262 = vmatprep.subr.mxu0 0.0
      %263 = vmatpush1.msra.mxu0 0.0
      %264 = vmatprep.subr.mxu0 0.0
      %265 = vmatpush1.msra.mxu0 0.0
      %266 = vmatprep.subr.mxu0 0.0
      %267 = vmatpush1.msra.mxu0 0.0
      %268 = vmatprep.subr.mxu0 0.0
      %269 = vmatpush1.msra.mxu0 0.0
      %270 = vmatprep.subr.mxu0 0.0
      %271 = vmatpush1.msra.mxu0 0.0
      %272 = vmatprep.subr.mxu0 0.0
      %273 = vmatpush1.msra.mxu0 0.0
      %274 = vmatprep.subr.mxu0 0.0
      %275 = vmatpush1.msra.mxu0 0.0
      %276 = vmatprep.subr.mxu0 0.0
      %277 = vmatpush1.msra.mxu0 0.0
      %278 = vmatprep.subr.mxu0 0.0
      %279 = vmatpush1.msra.mxu0 0.0
      %280 = vmatprep.subr.mxu0 0.0
      %281 = vmatpush1.msra.mxu0 0.0
      %282 = vmatprep.subr.mxu0 0.0
      %283 = vmatpush1.msra.mxu0 0.0
      %284 = vmatprep.subr.mxu0 0.0
      %285 = vmatpush1.msra.mxu0 0.0
      %286 = vmatprep.subr.mxu0 0.0
      %287 = vmatpush1.msra.mxu0 0.0
      %288 = vmatprep.mubr.f32.mxu0 0.0
      %289 = vmatmul.mubr.f32.gmra.mrb[0].mxu0 %v212
      %v290 = vpop.f32.mrb[0].mxu0
      %v291 = vadd.f32 0.0, %v290
      %v292 = vpop.f32.mrb[0].mxu0
      %v293 = vadd.f32 0.0, %v292
      %294 = vmatprep.mubr.f32.mxu0 0.0
      %295 = vmatmul.mubr.f32.gmra.mrb[0].mxu0 %v215
      %v296 = vpop.f32.mrb[0].mxu0
      %v297 = vadd.f32 0.0, %v296
      %v298 = vpop.f32.mrb[0].mxu0
      %v299 = vadd.f32 0.0, %v298
      %300 = vdwg.mxu0
      %v301 = vxor.u32 %v297, 2147483648
      %v302 = vxor.u32 %v299, 2147483648
      %v303 = vmul.f32 %v301, 1.442695
      %v304 = vpow.pop %v303
      %v305 = vmul.f32 %v302, 1.442695
      %v306 = vpow.pop %v305
      %v307 = vadd.f32 %v304, 1.0
      %v308 = vadd.f32 %v306, 1.0
      %v309 = vrcp.pop %v307
      %v310 = vmul.f32 1.0, %v309
      %v311 = vrcp.pop %v308
      %v312 = vmul.f32 1.0, %v311
      %v313 = vmul.f32 %v291, %v310
      %v314 = vmul.f32 %v293, %v312
      %315 = vst [vmem:[%s143] sm:$0xff] %v313
      %316 = vst [vmem:[%s143 + $0x8] sm:$0xff] %v314
      %p317 = scmp.lt.s32.totalorder %s13, 1
      %s318 = scalar_select %p317, %s13, 1
      %s319 = smul.addr %s318, 2
      %s320 = smul.addr %s319, 8
      %s321 = scalar_lea.vmem %s2, %s320
      // Predicated region
      $region29: #{tcn_layer_forward.1} parent=27 // pred_check
        %p322 = pneg %p78
      $region30: #{tcn_layer_forward.1} parent=27 // pred_check_branch
        %324 = sbr.rel (%p322) target = $region32
      $region31: #{tcn_layer_forward.1} parent=27 // pred_region
        _
      $region32: #{tcn_layer_forward.1} parent=27 // pred_fallthru
        _
    $region28: #{tcn_layer_forward.1} parent=5 // pred_fallthru
      _
    %p325 = scmp.le.s32.totalorder 2, %s8
    // Predicated region
    $region33: #{tcn_layer_forward.1} parent=5 // pred_check
      %p326 = pneg %p325
    $region34: #{tcn_layer_forward.1} parent=5 // pred_check_branch
      %328 = sbr.rel (%p326) target = $region36
    $region35: #{tcn_layer_forward.1} parent=5 // pred_region
      %s329 = ssub.s32 %s8, 2
      // Predicated region
      $region37: #{tcn_layer_forward.1} parent=35 // pred_check
        %p330 = pneg %p84
      $region38: #{tcn_layer_forward.1} parent=35 // pred_check_branch
        %332 = sbr.rel (%p330) target = $region40
      $region39: #{tcn_layer_forward.1} parent=35 // pred_region
        %p333 = scmp.lt.s32.totalorder %s14, 1
        %s334 = scalar_select %p333, %s14, 1
        %s335 = smul.addr %s334, 2
        %s336 = smul.addr %s335, 8
        %s337 = scalar_lea.vmem %s2, %s336
      $region40: #{tcn_layer_forward.1} parent=35 // pred_fallthru
        _
    $region36: #{tcn_layer_forward.1} parent=5 // pred_fallthru
      _
  $region6: #{tcn_layer_forward.1} parent=0 // loop_footer
    %s12 = sadd.s32 1, %s8
  $region7: #{tcn_layer_forward.1} parent=0 // loop_footer_branch
    %7 = sbr.rel target = $region3
  $region8: #{tcn_layer_forward.1} parent=0 // loop_exit
    _

</llo_original>
